<compile_context>
chip_gen: v5e
topology: v5e:2x2
jax: 0.10.0
libtpu: 0.0.40
codegen_flags: <defaults>
</compile_context>

<pallas_src>
import functools

import jax
import jax.numpy as jnp
from jax.experimental import pallas as pl
from jax.experimental.pallas import tpu as pltpu

BN_EPS = 1e-5


def _round_up(a, b):
    return (a + b - 1) // b * b


def _cdiv(a, b):
    return -(-a // b)


def _vmem_budget_bytes():
    """Per-core VMEM budget for tile sizing and vmem_limit_bytes.

    v5e/v6e (128 MiB physical) -> ~96 MiB, v7x (64 MiB) -> ~48 MiB.
    Conservative 48 MiB fallback if the hardware query is unavailable.
    """
    try:
        cap = pltpu.get_tpu_info().vmem_capacity_bytes
    except Exception:
        cap = 64 * 1024 * 1024
    return int(max(32 * 1024 * 1024, min(cap * 3 // 4, 100 * 1024 * 1024)))


# -----------------------------------------------------------------------------
# Pallas kernels
# -----------------------------------------------------------------------------
def _pw_kernel(x_ref, w_ref, b_ref, *rest, relu, has_ds, has_res):
    """1x1 conv (BN scale pre-folded into w) + bias, optionally fused with a
    second 1x1 conv (downsample branch) and/or a direct residual add, + ReLU.

    rest layout: [xd_ref, wd_ref, bd_ref]? + [res_ref]? + [o_ref]
    """
    o_ref = rest[-1]
    acc = jnp.dot(x_ref[...], w_ref[...], preferred_element_type=jnp.float32)
    acc = acc + b_ref[...]
    idx = 0
    if has_ds:
        xd_ref, wd_ref, bd_ref = rest[0], rest[1], rest[2]
        idx = 3
        acc = acc + jnp.dot(xd_ref[...], wd_ref[...],
                            preferred_element_type=jnp.float32) + bd_ref[...]
    if has_res:
        acc = acc + rest[idx][...].astype(jnp.float32)
    if relu:
        acc = jnp.maximum(acc, 0.0)
    o_ref[...] = acc.astype(o_ref.dtype)


def _conv3x3_kernel(x_hbm, w_ref, b_ref, o_ref, xbuf, sem, *,
                    stride, th, th_in, Wo, Cin, Cout):
    """3x3 conv (+folded-BN bias +ReLU) on one row band of one image.

    x_hbm: [N, Hp, Wp, Cin] padded activation left in HBM (pl.ANY); the band
    window is manually DMA'd into the double-buffered scratch `xbuf`.
    w_ref: [3, 3*Cin, Cout] ((kw, cin) flat on axis 1); b_ref: [1, Cout] f32;
    o_ref: dense [th*Wo, Cout] slab.
    """
    n = pl.program_id(0)
    b = pl.program_id(1)
    nb = pl.num_programs(1)
    slot = b % 2

    def start(band, buf_slot):
        r0 = band * (th * stride)
        pltpu.make_async_copy(
            x_hbm.at[n, pl.ds(r0, th_in)],
            xbuf.at[buf_slot],
            sem.at[buf_slot],
        ).start()

    # Prime the first band of this image; prefetch the next band while the
    # current one is being computed (double buffering across the band axis,
    # which is kept "arbitrary" so the chain never crosses a core boundary).
    @pl.when(b == 0)
    def _():
        start(0, 0)

    @pl.when(b + 1 < nb)
    def _():
        start(b + 1, 1 - slot)

    pltpu.make_async_copy(
        x_hbm.at[n, pl.ds(0, th_in)], xbuf.at[slot], sem.at[slot]).wait()

    def win(off, size):
        return pl.ds(off, size) if stride == 1 else pl.ds(off, size, stride)

    xs = xbuf.at[slot]
    acc = jnp.zeros((th * Wo, Cout), jnp.float32)
    for kh in range(3):
        # Width windows for the three kw taps, concatenated on the lane axis
        # so each per-kh matmul has K = 3*Cin (3 MXU dots instead of 9).
        taps = [xs[win(kh, th), win(kw, Wo), :] for kw in range(3)]
        patch = jnp.concatenate(taps, axis=-1).reshape(th * Wo, 3 * Cin)
        acc = acc + jnp.dot(patch, w_ref[kh],
                            preferred_element_type=jnp.float32)
    o_ref[...] = jnp.maximum(acc + b_ref[...], 0.0).astype(o_ref.dtype)


# -----------------------------------------------------------------------------
# pallas_call wrappers
# -----------------------------------------------------------------------------
def pointwise_conv_bn(x2d, w, bias, *, relu, ds=None, residual=None,
                      out_dtype=None, tile_rows=1024):
    """y = relu?(x2d @ w + bias [+ xd @ wd + bd] [+ residual]).

    x2d: [R, K1]; w: [K1, Cout] (BN scale pre-folded); bias: [Cout] (f32).
    ds: optional fused downsample branch (xd [R, K2], wd [K2, Cout], bd).
    residual: optional [R, Cout], added before the ReLU.
    """
    R, K1 = x2d.shape
    Cout = w.shape[1]
    out_dtype = out_dtype or x2d.dtype
    ebytes = jnp.dtype(x2d.dtype).itemsize
    obytes = jnp.dtype(out_dtype).itemsize
    budget = _vmem_budget_bytes()

    # Cout tiling: keep the weight / output blocks lane-dense and bounded.
    if Cout > 512 and Cout % 128 == 0:
        tn = 512 if Cout % 512 == 0 else (256 if Cout % 256 == 0 else 128)
    else:
        tn = Cout

    K2 = ds[0].shape[1] if ds is not None else 0
    rbytes = jnp.dtype(residual.dtype).itemsize if residual is not None else 0

    def vmem_est(tr):
        est = 2 * tr * K1 * ebytes                 # x blocks (double buffer)
        est += 2 * K1 * tn * ebytes + 2 * tn * 4   # w blocks + bias
        if ds is not None:
            est += 2 * tr * K2 * ebytes + 2 * K2 * tn * ebytes + 2 * tn * 4
        if residual is not None:
            est += 2 * tr * tn * rbytes
        est += 2 * tr * tn * obytes                # output blocks
        est += tr * tn * 4                         # f32 accumulator temps
        return est

    # Row tiling: large tiles amortize the ~0.35us/step overhead; 16-row
    # alignment keeps bf16 sublane pairs fully packed.
    R16 = _round_up(R, 16)
    tr = min(_round_up(tile_rows, 16), R16)
    while tr > 64 and vmem_est(tr) > budget:
        tr = max(16, _round_up(tr // 2, 16))
    Rp = _round_up(R, tr)

    def pad_rows(a):
        return jnp.pad(a, ((0, Rp - R), (0, 0))) if Rp != R else a

    args = [pad_rows(x2d), w, bias.reshape(1, Cout).astype(jnp.float32)]
    in_specs = [
        pl.BlockSpec((tr, K1), lambda i, j: (i, 0)),
        pl.BlockSpec((K1, tn), lambda i, j: (0, j)),
        pl.BlockSpec((1, tn), lambda i, j: (0, j)),
    ]
    has_ds = ds is not None
    if has_ds:
        xd, wd, bd = ds
        args += [pad_rows(xd), wd, bd.reshape(1, Cout).astype(jnp.float32)]
        in_specs += [
            pl.BlockSpec((tr, K2), lambda i, j: (i, 0)),
            pl.BlockSpec((K2, tn), lambda i, j: (0, j)),
            pl.BlockSpec((1, tn), lambda i, j: (0, j)),
        ]
    has_res = residual is not None
    if has_res:
        args.append(pad_rows(residual))
        in_specs.append(pl.BlockSpec((tr, tn), lambda i, j: (i, j)))

    out = pl.pallas_call(
        functools.partial(_pw_kernel, relu=relu, has_ds=has_ds,
                          has_res=has_res),
        out_shape=jax.ShapeDtypeStruct((Rp, Cout), out_dtype),
        grid=(Rp // tr, Cout // tn),
        in_specs=in_specs,
        out_specs=pl.BlockSpec((tr, tn), lambda i, j: (i, j)),
        compiler_params=pltpu.CompilerParams(
            dimension_semantics=("parallel", "parallel"),
            vmem_limit_bytes=budget),
    )(*args)
    return out[:R] if Rp != R else out


def conv3x3_bn_relu(x_nhwc, w3k, bias, *, stride, out_dtype=None,
                    target_rows=1024):
    """3x3 conv (stride, pad=1) + folded-BN bias + ReLU, row-band tiled NHWC.

    x_nhwc: [N, H, W, Cin]; w3k: [3, 3*Cin, Cout] (BN scale pre-folded);
    bias: [Cout] (f32).  Returns [N, Ho, Wo, Cout].
    """
    N, H, W, Cin = x_nhwc.shape
    Cout = w3k.shape[-1]
    Ho = (H - 1) // stride + 1
    Wo = (W - 1) // stride + 1
    out_dtype = out_dtype or x_nhwc.dtype
    ebytes = jnp.dtype(x_nhwc.dtype).itemsize
    obytes = jnp.dtype(out_dtype).itemsize
    budget = _vmem_budget_bytes()
    Wp = W + 2

    def vmem_est(th):
        th_in = (th - 1) * stride + 3
        est = 2 * th_in * Wp * Cin * ebytes            # manual double buffer
        est += 2 * 3 * (3 * Cin) * Cout * ebytes       # weight blocks
        est += 2 * Cout * 4                            # bias
        est += 2 * th * Wo * Cout * obytes             # output blocks
        est += 2 * th * Wo * (3 * Cin) * ebytes        # window temporaries
        est += th * Wo * Cout * 4                      # f32 accumulator
        return est

    # Band height: aim for ~target_rows matmul M rows / step within budget.
    th = max(1, min(Ho, _cdiv(target_rows, Wo)))
    while th > 1 and vmem_est(th) > budget:
        th = max(1, th // 2)
    nb = _cdiv(Ho, th)
    th_in = (th - 1) * stride + 3

    # TODO(synk): fold this pad into the conv1 epilogue (or handle halos with
    # per-edge DMAs) to remove the remaining out1 HBM round-trip.
    Hp_needed = (nb * th - 1) * stride + 3
    pad_bottom = max(1, Hp_needed - H - 1)
    xp = jnp.pad(x_nhwc, ((0, 0), (1, pad_bottom), (1, 1), (0, 0)))

    out = pl.pallas_call(
        functools.partial(_conv3x3_kernel, stride=stride, th=th, th_in=th_in,
                          Wo=Wo, Cin=Cin, Cout=Cout),
        out_shape=jax.ShapeDtypeStruct((N, nb, th * Wo, Cout), out_dtype),
        grid=(N, nb),
        in_specs=[
            pl.BlockSpec(memory_space=pl.ANY),           # padded x stays in HBM
            pl.BlockSpec((3, 3 * Cin, Cout), lambda n, b: (0, 0, 0)),
            pl.BlockSpec((1, Cout), lambda n, b: (0, 0)),
        ],
        out_specs=pl.BlockSpec((None, None, th * Wo, Cout),
                               lambda n, b: (n, b, 0, 0)),
        scratch_shapes=[
            pltpu.VMEM((2, th_in, Wp, Cin), x_nhwc.dtype),
            pltpu.SemaphoreType.DMA((2,)),
        ],
        compiler_params=pltpu.CompilerParams(
            dimension_semantics=("parallel", "arbitrary"),
            vmem_limit_bytes=budget),
    )(xp, w3k, bias.reshape(1, Cout).astype(jnp.float32))
    out = out.reshape(N, nb * th, Wo, Cout)
    return out[:, :Ho] if nb * th != Ho else out


# -----------------------------------------------------------------------------
# BottleNeck forward (glue in plain JAX, hot path in Pallas)
# -----------------------------------------------------------------------------
def _bn_fold(bn_params):
    gamma, beta, mean, var = bn_params
    scale = gamma / jnp.sqrt(var + BN_EPS)
    return scale, beta - mean * scale


def bottleneck_forward(x_nchw, params, *, stride=1,
                       compute_dtype=jnp.bfloat16):
    cd = compute_dtype
    # Single transpose+cast: no dead f32 NHWC intermediate in HBM.
    xc = jnp.transpose(x_nchw, (0, 2, 3, 1)).astype(cd)           # -> NHWC
    N, H, W, Cin = xc.shape
    planes = params["w1"].shape[1]
    Cout = params["w3"].shape[1]

    # Fold the BN scale into the conv weights (one-time, f32), cast to cd.
    s1, b1 = _bn_fold(params["bn1"])
    w1 = (params["w1"] * s1[None, :]).astype(cd)
    s2, b2 = _bn_fold(params["bn2"])
    w2 = (params["w2"] * s2[None, None, :]).reshape(
        3, 3 * planes, planes).astype(cd)
    s3, b3 = _bn_fold(params["bn3"])
    w3 = (params["w3"] * s3[None, :]).astype(cd)

    # conv1 (1x1) + bn1 + relu
    out1 = pointwise_conv_bn(xc.reshape(N * H * W, Cin), w1, b1, relu=True)
    out1 = out1.reshape(N, H, W, planes)

    # conv2 (3x3, stride, pad=1) + bn2 + relu
    out2 = conv3x3_bn_relu(out1, w2, b2, stride=stride)
    _, Ho, Wo, _ = out2.shape
    out2 = out2.reshape(N * Ho * Wo, planes)

    # conv3 (1x1) + bn3 + residual + relu, with the downsample 1x1 conv fused
    # into the same kernel; the [R, Cout] residual never round-trips HBM and
    # the output stays in the compute dtype (bf16 by default).
    # Note: the identity residual is the compute-dtype input (bf16 shortcut);
    # use compute_dtype=jnp.float32 for an exact f32 shortcut.
    if stride != 1 or Cin != Cout:
        sd, bd = _bn_fold(params["bnd"])
        wd = (params["wd"] * sd[None, :]).astype(cd)
        xs = xc[:, ::stride, ::stride, :] if stride != 1 else xc
        out = pointwise_conv_bn(out2, w3, b3, relu=True,
                                ds=(xs.reshape(N * Ho * Wo, Cin), wd, bd))
    else:
        out = pointwise_conv_bn(out2, w3, b3, relu=True,
                                residual=xc.reshape(N * Ho * Wo, Cout))
    out = out.reshape(N, Ho, Wo, Cout)
    return jnp.transpose(out, (0, 3, 1, 2))                       # -> NCHW


# -----------------------------------------------------------------------------
# Pure-JAX reference (for correctness check only)
# -----------------------------------------------------------------------------
def bottleneck_reference(x_nchw, params, *, stride=1):
    x = jnp.transpose(x_nchw, (0, 2, 3, 1)).astype(jnp.float32)

    def bn(y, p):
        gamma, beta, mean, var = p
        return (y - mean) / jnp.sqrt(var + BN_EPS) * gamma + beta

    def conv(y, w_hwio, s, pad):
        return jax.lax.conv_general_dilated(
            y, w_hwio, (s, s), pad,
            dimension_numbers=("NHWC", "HWIO", "NHWC"))

    Cin, planes = params["w1"].shape
    w1 = params["w1"].reshape(1, 1, Cin, planes)
    w2 = params["w2"].reshape(3, 3, planes, planes)
    w3 = params["w3"].reshape(1, 1, planes, params["w3"].shape[1])

    out = jax.nn.relu(bn(conv(x, w1, 1, [(0, 0), (0, 0)]), params["bn1"]))
    out = jax.nn.relu(bn(conv(out, w2, stride, [(1, 1), (1, 1)]),
                         params["bn2"]))
    out = bn(conv(out, w3, 1, [(0, 0), (0, 0)]), params["bn3"])
    if "wd" in params:
        wd = params["wd"].reshape(1, 1, Cin, params["wd"].shape[1])
        res = bn(conv(x, wd, stride, [(0, 0), (0, 0)]), params["bnd"])
    else:
        res = x
    out = jax.nn.relu(out + res)
    return jnp.transpose(out, (0, 3, 1, 2))


# -----------------------------------------------------------------------------
# Deterministic parameter construction + smoke test
# -----------------------------------------------------------------------------
def make_params(key, inplanes, planes, stride):
    expansion = 4
    cout = planes * expansion
    ks = jax.random.split(key, 12)

    def bn_init(k, c):
        k0, k1, k2, k3 = jax.random.split(k, 4)
        gamma = 1.0 + 0.1 * jax.random.uniform(k0, (c,), jnp.float32)
        beta = 0.05 * jax.random.normal(k1, (c,), jnp.float32)
        mean = 0.1 * jax.random.normal(k2, (c,), jnp.float32)
        var = 0.5 + jax.random.uniform(k3, (c,), jnp.float32)
        return (gamma, beta, mean, var)

    params = {
        "w1": 0.2 * jax.random.normal(ks[0], (inplanes, planes), jnp.float32),
        "bn1": bn_init(ks[1], planes),
        "w2": 0.2 * jax.random.normal(ks[2], (9, planes, planes), jnp.float32),
        "bn2": bn_init(ks[3], planes),
        "w3": 0.2 * jax.random.normal(ks[4], (planes, cout), jnp.float32),
        "bn3": bn_init(ks[5], cout),
    }
    if stride != 1 or inplanes != cout:
        params["wd"] = 0.2 * jax.random.normal(ks[6], (inplanes, cout),
                                               jnp.float32)
        params["bnd"] = bn_init(ks[7], cout)
    return params


if __name__ == "__main__":
    key = jax.random.PRNGKey(0)
    kx, kp, k2 = jax.random.split(key, 3)

    # Config A: channel expansion -> fused downsample branch, stride=1.
    N, inplanes, planes, H, W, stride = 2, 4, 4, 16, 16, 1
    x = jax.random.normal(kx, (N, inplanes, H, W), jnp.float32)   # NCHW
    params = make_params(kp, inplanes, planes, stride)
    ref = jax.block_until_ready(bottleneck_reference(x, params, stride=stride))

    out_f32 = jax.block_until_ready(
        bottleneck_forward(x, params, stride=stride,
                           compute_dtype=jnp.float32))
    assert out_f32.shape == (N, planes * 4, H, W), out_f32.shape
    assert jnp.allclose(out_f32, ref, atol=2e-2, rtol=2e-2), float(
        jnp.max(jnp.abs(out_f32 - ref)))

    out_bf16 = jax.block_until_ready(
        bottleneck_forward(x, params, stride=stride,
                           compute_dtype=jnp.bfloat16))
    assert jnp.allclose(out_bf16.astype(jnp.float32), ref,
                        atol=1.5e-1, rtol=1.5e-1), float(
        jnp.max(jnp.abs(out_bf16.astype(jnp.float32) - ref)))

    # Config B: inplanes == planes*4 -> identity residual path.
    N2, planes2, H2, W2 = 2, 4, 8, 8
    inplanes2 = planes2 * 4
    kx2, kp2 = jax.random.split(k2)
    x2 = jax.random.normal(kx2, (N2, inplanes2, H2, W2), jnp.float32)
    params2 = make_params(kp2, inplanes2, planes2, 1)
    ref2 = jax.block_until_ready(bottleneck_reference(x2, params2, stride=1))
    out2 = jax.block_until_ready(
        bottleneck_forward(x2, params2, stride=1,
                           compute_dtype=jnp.bfloat16))
    assert out2.shape == (N2, planes2 * 4, H2, W2), out2.shape
    assert jnp.allclose(out2.astype(jnp.float32), ref2,
                        atol=1.5e-1, rtol=1.5e-1), float(
        jnp.max(jnp.abs(out2.astype(jnp.float32) - ref2)))

    print("KERNEL_OK")
</pallas_src>

<mosaic_0001>
module attributes {stable_mosaic.version = 11 : i64} {
  func.func @_pw_kernel(%arg0: i32, %arg1: i32, %arg2: memref<512x4xf32, #tpu.memory_space<vmem>>, %arg3: memref<4x4xf32, #tpu.memory_space<vmem>>, %arg4: memref<1x4xf32, #tpu.memory_space<vmem>>, %arg5: memref<512x4xf32, #tpu.memory_space<vmem>>) attributes {dimension_semantics = [#tpu.dimension_semantics<parallel>, #tpu.dimension_semantics<parallel>], iteration_bounds = array<i64: 1, 1>, scalar_prefetch = 0 : i64, scratch_operands = 0 : i64, tpu.core_type = #tpu.core_type<tc>, window_params = [{transform_indices = @transform_0, window_bounds = array<i64: 512, 4>}, {transform_indices = @transform_1, window_bounds = array<i64: 4, 4>}, {transform_indices = @transform_2, window_bounds = array<i64: 1, 4>}, {transform_indices = @transform_3, window_bounds = array<i64: 512, 4>}]} {
    %c0 = arith.constant 0 : index
    %c0_0 = arith.constant 0 : index
    %0 = vector.load %arg2[%c0, %c0_0] : memref<512x4xf32, #tpu.memory_space<vmem>>, vector<512x4xf32>
    %c0_1 = arith.constant 0 : index
    %c0_2 = arith.constant 0 : index
    %1 = vector.load %arg3[%c0_1, %c0_2] : memref<4x4xf32, #tpu.memory_space<vmem>>, vector<4x4xf32>
    %cst = arith.constant dense<0.000000e+00> : vector<512x4xf32>
    %2 = tpu.matmul %0, %1, %cst {dimension_numbers = #tpu.dot_dimension_numbers<[1], [0], [0], [1], [0, 0, 1, 1], [], []>} : vector<512x4xf32>, vector<4x4xf32>, vector<512x4xf32> -> vector<512x4xf32>
    %c0_3 = arith.constant 0 : index
    %c0_4 = arith.constant 0 : index
    %3 = vector.load %arg4[%c0_3, %c0_4] : memref<1x4xf32, #tpu.memory_space<vmem>>, vector<1x4xf32>
    %4 = vector.broadcast %3 : vector<1x4xf32> to vector<512x4xf32>
    %5 = arith.addf %2, %4 : vector<512x4xf32>
    %cst_5 = arith.constant 0.000000e+00 : f32
    %6 = vector.broadcast %cst_5 : f32 to vector<512x4xf32>
    %7 = arith.maximumf %5, %6 : vector<512x4xf32>
    %c0_6 = arith.constant 0 : index
    %c0_7 = arith.constant 0 : index
    %8 = vector.load %arg5[%c0_6, %c0_7] : memref<512x4xf32, #tpu.memory_space<vmem>>, vector<512x4xf32>
    tpu.vector_store %arg5[%c0_6, %c0_7], %7 {strides = array<i32>} : memref<512x4xf32, #tpu.memory_space<vmem>>, vector<512x4xf32>,
    return
  }
  func.func @transform_0(%arg0: i32, %arg1: i32) -> (i32, i32) {
    %c0_i32 = arith.constant 0 : i32
    %c0_i32_0 = arith.constant 0 : i32
    return %arg0, %c0_i32 : i32, i32
  }
  func.func @transform_1(%arg0: i32, %arg1: i32) -> (i32, i32) {
    %c0_i32 = arith.constant 0 : i32
    %c0_i32_0 = arith.constant 0 : i32
    return %c0_i32, %arg1 : i32, i32
  }
  func.func @transform_2(%arg0: i32, %arg1: i32) -> (i32, i32) {
    %c0_i32 = arith.constant 0 : i32
    %c0_i32_0 = arith.constant 0 : i32
    return %c0_i32, %arg1 : i32, i32
  }
  func.func @transform_3(%arg0: i32, %arg1: i32) -> (i32, i32) {
    %c0_i32 = arith.constant 0 : i32
    return %arg0, %arg1 : i32, i32
  }
}

</mosaic_0001>

<llo_original>
// kernel: tpu_custom_call.1
$region0: #{tpu_custom_call.1}
  #allocation0 [shape = 'u32[]', space=smem, size = 0x4, offset = 0x4, fixed_abs, tag = 'smem constant byte address 0x4 - core index']
  #allocation1 [shape = 'u32[72,128]{1,0:T(1,128)}', space=vmem, size = 0x9000, scoped, tag = 'internal scratch']
  %s0 = inlined_call_operand.vmem [shape: f32[512,4], index: 0, kind: input, shape index: {}]
  %s1 = inlined_call_operand.vmem [shape: f32[4,4], index: 1, kind: input, shape index: {}]
  %s2 = inlined_call_operand.vmem [shape: f32[1,4], index: 2, kind: input, shape index: {}]
  %s3 = inlined_call_operand.vmem [shape: f32[512,4], index: 3, kind: output, shape index: {}]
  %s4 = sld [smem:[#allocation0]]
  $region22: #{tpu_custom_call.1} parent=0
    _
  %s6 = ssub.s32 1, %s4
  %s7 = scalar_select 0, %s6, %s4
  // Predicated region
  $region2: #{tpu_custom_call.1} parent=0 // pred_check
    _
  $region3: #{tpu_custom_call.1} parent=0 // pred_check_branch
    %9 = sbr.rel (0) target = $region5
  $region4: #{tpu_custom_call.1} parent=0 // pred_region
    _
  $region5: #{tpu_custom_call.1} parent=0 // pred_fallthru
    _
  // Predicated region
  $region6: #{tpu_custom_call.1} parent=0 // pred_check
    _
  $region7: #{tpu_custom_call.1} parent=0 // pred_check_branch
    %11 = sbr.rel (0) target = $region9
  $region8: #{tpu_custom_call.1} parent=0 // pred_region
    _
  $region9: #{tpu_custom_call.1} parent=0 // pred_fallthru
    _
  // Predicated region
  $region10: #{tpu_custom_call.1} parent=0 // pred_check
    _
  $region11: #{tpu_custom_call.1} parent=0 // pred_check_branch
    %13 = sbr.rel (0) target = $region13
  $region12: #{tpu_custom_call.1} parent=0 // pred_region
    _
  $region13: #{tpu_custom_call.1} parent=0 // pred_fallthru
    _
  %v14 = vld [vmem:[%s0] sm:$0xff]
  %v15 = vld [vmem:[%s0 + $0x8] sm:$0xff]
  %v16 = vld [vmem:[%s0 + $0x10] sm:$0xff]
  %v17 = vld [vmem:[%s0 + $0x18] sm:$0xff]
  %v18 = vld [vmem:[%s0 + $0x20] sm:$0xff]
  %v19 = vld [vmem:[%s0 + $0x28] sm:$0xff]
  %v20 = vld [vmem:[%s0 + $0x30] sm:$0xff]
  %v21 = vld [vmem:[%s0 + $0x38] sm:$0xff]
  %v22 = vld [vmem:[%s0 + $0x40] sm:$0xff]
  %v23 = vld [vmem:[%s0 + $0x48] sm:$0xff]
  %v24 = vld [vmem:[%s0 + $0x50] sm:$0xff]
  %v25 = vld [vmem:[%s0 + $0x58] sm:$0xff]
  %v26 = vld [vmem:[%s0 + $0x60] sm:$0xff]
  %v27 = vld [vmem:[%s0 + $0x68] sm:$0xff]
  %v28 = vld [vmem:[%s0 + $0x70] sm:$0xff]
  %v29 = vld [vmem:[%s0 + $0x78] sm:$0xff]
  %v30 = vld [vmem:[%s0 + $0x80] sm:$0xff]
  %v31 = vld [vmem:[%s0 + $0x88] sm:$0xff]
  %v32 = vld [vmem:[%s0 + $0x90] sm:$0xff]
  %v33 = vld [vmem:[%s0 + $0x98] sm:$0xff]
  %v34 = vld [vmem:[%s0 + $0xa0] sm:$0xff]
  %v35 = vld [vmem:[%s0 + $0xa8] sm:$0xff]
  %v36 = vld [vmem:[%s0 + $0xb0] sm:$0xff]
  %v37 = vld [vmem:[%s0 + $0xb8] sm:$0xff]
  %v38 = vld [vmem:[%s0 + $0xc0] sm:$0xff]
  %v39 = vld [vmem:[%s0 + $0xc8] sm:$0xff]
  %v40 = vld [vmem:[%s0 + $0xd0] sm:$0xff]
  %v41 = vld [vmem:[%s0 + $0xd8] sm:$0xff]
  %v42 = vld [vmem:[%s0 + $0xe0] sm:$0xff]
  %v43 = vld [vmem:[%s0 + $0xe8] sm:$0xff]
  %v44 = vld [vmem:[%s0 + $0xf0] sm:$0xff]
  %v45 = vld [vmem:[%s0 + $0xf8] sm:$0xff]
  %v46 = vld [vmem:[%s0 + $0x100] sm:$0xff]
  %v47 = vld [vmem:[%s0 + $0x108] sm:$0xff]
  %v48 = vld [vmem:[%s0 + $0x110] sm:$0xff]
  %v49 = vld [vmem:[%s0 + $0x118] sm:$0xff]
  %v50 = vld [vmem:[%s0 + $0x120] sm:$0xff]
  %v51 = vld [vmem:[%s0 + $0x128] sm:$0xff]
  %v52 = vld [vmem:[%s0 + $0x130] sm:$0xff]
  %v53 = vld [vmem:[%s0 + $0x138] sm:$0xff]
  %v54 = vld [vmem:[%s0 + $0x140] sm:$0xff]
  %v55 = vld [vmem:[%s0 + $0x148] sm:$0xff]
  %v56 = vld [vmem:[%s0 + $0x150] sm:$0xff]
  %v57 = vld [vmem:[%s0 + $0x158] sm:$0xff]
  %v58 = vld [vmem:[%s0 + $0x160] sm:$0xff]
  %v59 = vld [vmem:[%s0 + $0x168] sm:$0xff]
  %v60 = vld [vmem:[%s0 + $0x170] sm:$0xff]
  %v61 = vld [vmem:[%s0 + $0x178] sm:$0xff]
  %v62 = vld [vmem:[%s0 + $0x180] sm:$0xff]
  %v63 = vld [vmem:[%s0 + $0x188] sm:$0xff]
  %v64 = vld [vmem:[%s0 + $0x190] sm:$0xff]
  %v65 = vld [vmem:[%s0 + $0x198] sm:$0xff]
  %v66 = vld [vmem:[%s0 + $0x1a0] sm:$0xff]
  %v67 = vld [vmem:[%s0 + $0x1a8] sm:$0xff]
  %v68 = vld [vmem:[%s0 + $0x1b0] sm:$0xff]
  %v69 = vld [vmem:[%s0 + $0x1b8] sm:$0xff]
  %v70 = vld [vmem:[%s0 + $0x1c0] sm:$0xff]
  %v71 = vld [vmem:[%s0 + $0x1c8] sm:$0xff]
  %v72 = vld [vmem:[%s0 + $0x1d0] sm:$0xff]
  %v73 = vld [vmem:[%s0 + $0x1d8] sm:$0xff]
  %v74 = vld [vmem:[%s0 + $0x1e0] sm:$0xff]
  %v75 = vld [vmem:[%s0 + $0x1e8] sm:$0xff]
  %v76 = vld [vmem:[%s0 + $0x1f0] sm:$0xff]
  %v77 = vld [vmem:[%s0 + $0x1f8] sm:$0xff]
  %v78 = vld [vmem:[%s1] sm:$0xf]
  %v79 = vld [vmem:[%s2] sm:$0x1]
  %v81 = vperm.slane %v79, 0
  %vm83 = vcmask 31744
  %v85 = vsel %vm83, %v14, 0
  %v88 = vsel %vm83, %v15, 0
  %v91 = vsel %vm83, %v16, 0
  %v94 = vsel %vm83, %v17, 0
  %v97 = vsel %vm83, %v18, 0
  %v100 = vsel %vm83, %v19, 0
  %v103 = vsel %vm83, %v20, 0
  %v106 = vsel %vm83, %v21, 0
  %v109 = vsel %vm83, %v22, 0
  %v112 = vsel %vm83, %v23, 0
  %v115 = vsel %vm83, %v24, 0
  %v118 = vsel %vm83, %v25, 0
  %v121 = vsel %vm83, %v26, 0
  %v124 = vsel %vm83, %v27, 0
  %v127 = vsel %vm83, %v28, 0
  %v130 = vsel %vm83, %v29, 0
  %v133 = vsel %vm83, %v30, 0
  %v136 = vsel %vm83, %v31, 0
  %v139 = vsel %vm83, %v32, 0
  %v142 = vsel %vm83, %v33, 0
  %v145 = vsel %vm83, %v34, 0
  %v148 = vsel %vm83, %v35, 0
  %v151 = vsel %vm83, %v36, 0
  %v154 = vsel %vm83, %v37, 0
  %v157 = vsel %vm83, %v38, 0
  %v160 = vsel %vm83, %v39, 0
  %v163 = vsel %vm83, %v40, 0
  %v166 = vsel %vm83, %v41, 0
  %v169 = vsel %vm83, %v42, 0
  %v172 = vsel %vm83, %v43, 0
  %v175 = vsel %vm83, %v44, 0
  %v178 = vsel %vm83, %v45, 0
  %v181 = vsel %vm83, %v46, 0
  %v184 = vsel %vm83, %v47, 0
  %v187 = vsel %vm83, %v48, 0
  %v190 = vsel %vm83, %v49, 0
  %v193 = vsel %vm83, %v50, 0
  %v196 = vsel %vm83, %v51, 0
  %v199 = vsel %vm83, %v52, 0
  %v202 = vsel %vm83, %v53, 0
  %v205 = vsel %vm83, %v54, 0
  %v208 = vsel %vm83, %v55, 0
  %v211 = vsel %vm83, %v56, 0
  %v214 = vsel %vm83, %v57, 0
  %v217 = vsel %vm83, %v58, 0
  %v220 = vsel %vm83, %v59, 0
  %v223 = vsel %vm83, %v60, 0
  %v226 = vsel %vm83, %v61, 0
  %v229 = vsel %vm83, %v62, 0
  %v232 = vsel %vm83, %v63, 0
  %v235 = vsel %vm83, %v64, 0
  %v238 = vsel %vm83, %v65, 0
  %v241 = vsel %vm83, %v66, 0
  %v244 = vsel %vm83, %v67, 0
  %v247 = vsel %vm83, %v68, 0
  %v250 = vsel %vm83, %v69, 0
  %v253 = vsel %vm83, %v70, 0
  %v256 = vsel %vm83, %v71, 0
  %v259 = vsel %vm83, %v72, 0
  %v262 = vsel %vm83, %v73, 0
  %v265 = vsel %vm83, %v74, 0
  %v268 = vsel %vm83, %v75, 0
  %v271 = vsel %vm83, %v76, 0
  %v274 = vsel %vm83, %v77, 0
  %vm276 = vcmask 1043456
  %v278 = vsel %vm276, %v78, 0
  %280 = vmatpush.msra.mxu0 0.0
  %281 = vmatpush.msra.mxu0 0.0
  %282 = vmatpush.msra.mxu0 0.0
  %283 = vmatpush.msra.mxu0 0.0
  %284 = vmatpush.msra.mxu0 0.0
  %285 = vmatpush.msra.mxu0 0.0
  %286 = vmatpush.msra.mxu0 0.0
  %287 = vmatpush.msra.mxu0 0.0
  %288 = vmatpush.msra.mxu0 0.0
  %289 = vmatpush.msra.mxu0 0.0
  %290 = vmatpush.msra.mxu0 0.0
  %291 = vmatpush.msra.mxu0 0.0
  %292 = vmatpush.msra.mxu0 0.0
  %293 = vmatpush.msra.mxu0 0.0
  %294 = vmatpush.msra.mxu0 0.0
  %295 = vmatpush.msra.mxu0 %v278
  %296 = vmatmul.f32.gmra.mxu0 %v85
  %v297 = vpop.f32.mrf.mxu0
  %v298 = vadd.f32 %v81, %v297
  %299 = vmatmul.f32.gmra.mxu0 %v88
  %v300 = vpop.f32.mrf.mxu0
  %v301 = vadd.f32 %v81, %v300
  %302 = vmatmul.f32.gmra.mxu0 %v91
  %v303 = vpop.f32.mrf.mxu0
  %v304 = vadd.f32 %v81, %v303
  %305 = vmatmul.f32.gmra.mxu0 %v94
  %v306 = vpop.f32.mrf.mxu0
  %v307 = vadd.f32 %v81, %v306
  %308 = vmatmul.f32.gmra.mxu0 %v97
  %v309 = vpop.f32.mrf.mxu0
  %v310 = vadd.f32 %v81, %v309
  %311 = vmatmul.f32.gmra.mxu0 %v100
  %v312 = vpop.f32.mrf.mxu0
  %v313 = vadd.f32 %v81, %v312
  %314 = vmatmul.f32.gmra.mxu0 %v103
  %v315 = vpop.f32.mrf.mxu0
  %v316 = vadd.f32 %v81, %v315
  %317 = vmatmul.f32.gmra.mxu0 %v106
  %v318 = vpop.f32.mrf.mxu0
  %v319 = vadd.f32 %v81, %v318
  %320 = vmatmul.f32.gmra.mxu0 %v109
  %v321 = vpop.f32.mrf.mxu0
  %v322 = vadd.f32 %v81, %v321
  %323 = vmatmul.f32.gmra.mxu0 %v112
  %v324 = vpop.f32.mrf.mxu0
  %v325 = vadd.f32 %v81, %v324
  %326 = vmatmul.f32.gmra.mxu0 %v115
  %v327 = vpop.f32.mrf.mxu0
  %v328 = vadd.f32 %v81, %v327
  %329 = vmatmul.f32.gmra.mxu0 %v118
  %v330 = vpop.f32.mrf.mxu0
  %v331 = vadd.f32 %v81, %v330
  %332 = vmatmul.f32.gmra.mxu0 %v121
  %v333 = vpop.f32.mrf.mxu0
  %v334 = vadd.f32 %v81, %v333
  %335 = vmatmul.f32.gmra.mxu0 %v124
  %v336 = vpop.f32.mrf.mxu0
  %v337 = vadd.f32 %v81, %v336
  %338 = vmatmul.f32.gmra.mxu0 %v127
  %v339 = vpop.f32.mrf.mxu0
  %v340 = vadd.f32 %v81, %v339
  %341 = vmatmul.f32.gmra.mxu0 %v130
  %v342 = vpop.f32.mrf.mxu0
  %v343 = vadd.f32 %v81, %v342
  %344 = vmatmul.f32.gmra.mxu0 %v133
  %v345 = vpop.f32.mrf.mxu0
  %v346 = vadd.f32 %v81, %v345
  %347 = vmatmul.f32.gmra.mxu0 %v136
  %v348 = vpop.f32.mrf.mxu0
  %v349 = vadd.f32 %v81, %v348
  %350 = vmatmul.f32.gmra.mxu0 %v139
  %v351 = vpop.f32.mrf.mxu0
  %v352 = vadd.f32 %v81, %v351
  %353 = vmatmul.f32.gmra.mxu0 %v142
  %v354 = vpop.f32.mrf.mxu0
  %v355 = vadd.f32 %v81, %v354
  %356 = vmatmul.f32.gmra.mxu0 %v145
  %v357 = vpop.f32.mrf.mxu0
  %v358 = vadd.f32 %v81, %v357
  %359 = vmatmul.f32.gmra.mxu0 %v148
  %v360 = vpop.f32.mrf.mxu0
  %v361 = vadd.f32 %v81, %v360
  %362 = vmatmul.f32.gmra.mxu0 %v151
  %v363 = vpop.f32.mrf.mxu0
  %v364 = vadd.f32 %v81, %v363
  %365 = vmatmul.f32.gmra.mxu0 %v154
  %v366 = vpop.f32.mrf.mxu0
  %v367 = vadd.f32 %v81, %v366
  %368 = vmatmul.f32.gmra.mxu0 %v157
  %v369 = vpop.f32.mrf.mxu0
  %v370 = vadd.f32 %v81, %v369
  %371 = vmatmul.f32.gmra.mxu0 %v160
  %v372 = vpop.f32.mrf.mxu0
  %v373 = vadd.f32 %v81, %v372
  %374 = vmatmul.f32.gmra.mxu0 %v163
  %v375 = vpop.f32.mrf.mxu0
  %v376 = vadd.f32 %v81, %v375
  %377 = vmatmul.f32.gmra.mxu0 %v166
  %v378 = vpop.f32.mrf.mxu0
  %v379 = vadd.f32 %v81, %v378
  %380 = vmatmul.f32.gmra.mxu0 %v169
  %v381 = vpop.f32.mrf.mxu0
  %v382 = vadd.f32 %v81, %v381
  %383 = vmatmul.f32.gmra.mxu0 %v172
  %v384 = vpop.f32.mrf.mxu0
  %v385 = vadd.f32 %v81, %v384
  %386 = vmatmul.f32.gmra.mxu0 %v175
  %v387 = vpop.f32.mrf.mxu0
  %v388 = vadd.f32 %v81, %v387
  %389 = vmatmul.f32.gmra.mxu0 %v178
  %v390 = vpop.f32.mrf.mxu0
  %v391 = vadd.f32 %v81, %v390
  %392 = vmatmul.f32.gmra.mxu0 %v181
  %v393 = vpop.f32.mrf.mxu0
  %v394 = vadd.f32 %v81, %v393
  %395 = vmatmul.f32.gmra.mxu0 %v184
  %v396 = vpop.f32.mrf.mxu0
  %v397 = vadd.f32 %v81, %v396
  %398 = vmatmul.f32.gmra.mxu0 %v187
  %v399 = vpop.f32.mrf.mxu0
  %v400 = vadd.f32 %v81, %v399
  %401 = vmatmul.f32.gmra.mxu0 %v190
  %v402 = vpop.f32.mrf.mxu0
  %v403 = vadd.f32 %v81, %v402
  %404 = vmatmul.f32.gmra.mxu0 %v193
  %v405 = vpop.f32.mrf.mxu0
  %v406 = vadd.f32 %v81, %v405
  %407 = vmatmul.f32.gmra.mxu0 %v196
  %v408 = vpop.f32.mrf.mxu0
  %v409 = vadd.f32 %v81, %v408
  %410 = vmatmul.f32.gmra.mxu0 %v199
  %v411 = vpop.f32.mrf.mxu0
  %v412 = vadd.f32 %v81, %v411
  %413 = vmatmul.f32.gmra.mxu0 %v202
  %v414 = vpop.f32.mrf.mxu0
  %v415 = vadd.f32 %v81, %v414
  %416 = vmatmul.f32.gmra.mxu0 %v205
  %v417 = vpop.f32.mrf.mxu0
  %v418 = vadd.f32 %v81, %v417
  %419 = vmatmul.f32.gmra.mxu0 %v208
  %v420 = vpop.f32.mrf.mxu0
  %v421 = vadd.f32 %v81, %v420
  %422 = vmatmul.f32.gmra.mxu0 %v211
  %v423 = vpop.f32.mrf.mxu0
  %v424 = vadd.f32 %v81, %v423
  %425 = vmatmul.f32.gmra.mxu0 %v214
  %v426 = vpop.f32.mrf.mxu0
  %v427 = vadd.f32 %v81, %v426
  %428 = vmatmul.f32.gmra.mxu0 %v217
  %v429 = vpop.f32.mrf.mxu0
  %v430 = vadd.f32 %v81, %v429
  %431 = vmatmul.f32.gmra.mxu0 %v220
  %v432 = vpop.f32.mrf.mxu0
  %v433 = vadd.f32 %v81, %v432
  %434 = vmatmul.f32.gmra.mxu0 %v223
  %v435 = vpop.f32.mrf.mxu0
  %v436 = vadd.f32 %v81, %v435
  %437 = vmatmul.f32.gmra.mxu0 %v226
  %v438 = vpop.f32.mrf.mxu0
  %v439 = vadd.f32 %v81, %v438
  %440 = vmatmul.f32.gmra.mxu0 %v229
  %v441 = vpop.f32.mrf.mxu0
  %v442 = vadd.f32 %v81, %v441
  %443 = vmatmul.f32.gmra.mxu0 %v232
  %v444 = vpop.f32.mrf.mxu0
  %v445 = vadd.f32 %v81, %v444
  %446 = vmatmul.f32.gmra.mxu0 %v235
  %v447 = vpop.f32.mrf.mxu0
  %v448 = vadd.f32 %v81, %v447
  %449 = vmatmul.f32.gmra.mxu0 %v238
  %v450 = vpop.f32.mrf.mxu0
  %v451 = vadd.f32 %v81, %v450
  %452 = vmatmul.f32.gmra.mxu0 %v241
  %v453 = vpop.f32.mrf.mxu0
  %v454 = vadd.f32 %v81, %v453
  %455 = vmatmul.f32.gmra.mxu0 %v244
  %v456 = vpop.f32.mrf.mxu0
  %v457 = vadd.f32 %v81, %v456
  %458 = vmatmul.f32.gmra.mxu0 %v247
  %v459 = vpop.f32.mrf.mxu0
  %v460 = vadd.f32 %v81, %v459
  %461 = vmatmul.f32.gmra.mxu0 %v250
  %v462 = vpop.f32.mrf.mxu0
  %v463 = vadd.f32 %v81, %v462
  %464 = vmatmul.f32.gmra.mxu0 %v253
  %v465 = vpop.f32.mrf.mxu0
  %v466 = vadd.f32 %v81, %v465
  %467 = vmatmul.f32.gmra.mxu0 %v256
  %v468 = vpop.f32.mrf.mxu0
  %v469 = vadd.f32 %v81, %v468
  %470 = vmatmul.f32.gmra.mxu0 %v259
  %v471 = vpop.f32.mrf.mxu0
  %v472 = vadd.f32 %v81, %v471
  %473 = vmatmul.f32.gmra.mxu0 %v262
  %v474 = vpop.f32.mrf.mxu0
  %v475 = vadd.f32 %v81, %v474
  %476 = vmatmul.f32.gmra.mxu0 %v265
  %v477 = vpop.f32.mrf.mxu0
  %v478 = vadd.f32 %v81, %v477
  %479 = vmatmul.f32.gmra.mxu0 %v268
  %v480 = vpop.f32.mrf.mxu0
  %v481 = vadd.f32 %v81, %v480
  %482 = vmatmul.f32.gmra.mxu0 %v271
  %v483 = vpop.f32.mrf.mxu0
  %v484 = vadd.f32 %v81, %v483
  %485 = vmatmul.f32.gmra.mxu0 %v274
  %v486 = vpop.f32.mrf.mxu0
  %v487 = vadd.f32 %v81, %v486
  %488 = vdwg.mxu0
  %v489 = vmax.f32 %v298, 0.0
  %v490 = vmax.f32 %v301, 0.0
  %v491 = vmax.f32 %v304, 0.0
  %v492 = vmax.f32 %v307, 0.0
  %v493 = vmax.f32 %v310, 0.0
  %v494 = vmax.f32 %v313, 0.0
  %v495 = vmax.f32 %v316, 0.0
  %v496 = vmax.f32 %v319, 0.0
  %v497 = vmax.f32 %v322, 0.0
  %v498 = vmax.f32 %v325, 0.0
  %v499 = vmax.f32 %v328, 0.0
  %v500 = vmax.f32 %v331, 0.0
  %v501 = vmax.f32 %v334, 0.0
  %v502 = vmax.f32 %v337, 0.0
  %v503 = vmax.f32 %v340, 0.0
  %v504 = vmax.f32 %v343, 0.0
  %v505 = vmax.f32 %v346, 0.0
  %v506 = vmax.f32 %v349, 0.0
  %v507 = vmax.f32 %v352, 0.0
  %v508 = vmax.f32 %v355, 0.0
  %v509 = vmax.f32 %v358, 0.0
  %v510 = vmax.f32 %v361, 0.0
  %v511 = vmax.f32 %v364, 0.0
  %v512 = vmax.f32 %v367, 0.0
  %v513 = vmax.f32 %v370, 0.0
  %v514 = vmax.f32 %v373, 0.0
  %v515 = vmax.f32 %v376, 0.0
  %v516 = vmax.f32 %v379, 0.0
  %v517 = vmax.f32 %v382, 0.0
  %v518 = vmax.f32 %v385, 0.0
  %v519 = vmax.f32 %v388, 0.0
  %v520 = vmax.f32 %v391, 0.0
  %v521 = vmax.f32 %v394, 0.0
  %v522 = vmax.f32 %v397, 0.0
  %v523 = vmax.f32 %v400, 0.0
  %v524 = vmax.f32 %v403, 0.0
  %v525 = vmax.f32 %v406, 0.0
  %v526 = vmax.f32 %v409, 0.0
  %v527 = vmax.f32 %v412, 0.0
  %v528 = vmax.f32 %v415, 0.0
  %v529 = vmax.f32 %v418, 0.0
  %v530 = vmax.f32 %v421, 0.0
  %v531 = vmax.f32 %v424, 0.0
  %v532 = vmax.f32 %v427, 0.0
  %v533 = vmax.f32 %v430, 0.0
  %v534 = vmax.f32 %v433, 0.0
  %v535 = vmax.f32 %v436, 0.0
  %v536 = vmax.f32 %v439, 0.0
  %v537 = vmax.f32 %v442, 0.0
  %v538 = vmax.f32 %v445, 0.0
  %v539 = vmax.f32 %v448, 0.0
  %v540 = vmax.f32 %v451, 0.0
  %v541 = vmax.f32 %v454, 0.0
  %v542 = vmax.f32 %v457, 0.0
  %v543 = vmax.f32 %v460, 0.0
  %v544 = vmax.f32 %v463, 0.0
  %v545 = vmax.f32 %v466, 0.0
  %v546 = vmax.f32 %v469, 0.0
  %v547 = vmax.f32 %v472, 0.0
  %v548 = vmax.f32 %v475, 0.0
  %v549 = vmax.f32 %v478, 0.0
  %v550 = vmax.f32 %v481, 0.0
  %v551 = vmax.f32 %v484, 0.0
  %v552 = vmax.f32 %v487, 0.0
  %553 = vst.msk [vmem:[%s3] sm:$0xff] %vm83, %v489
  %554 = vst.msk [vmem:[%s3 + $0x8] sm:$0xff] %vm83, %v490
  %555 = vst.msk [vmem:[%s3 + $0x10] sm:$0xff] %vm83, %v491
  %556 = vst.msk [vmem:[%s3 + $0x18] sm:$0xff] %vm83, %v492
  %557 = vst.msk [vmem:[%s3 + $0x20] sm:$0xff] %vm83, %v493
  %558 = vst.msk [vmem:[%s3 + $0x28] sm:$0xff] %vm83, %v494
  %559 = vst.msk [vmem:[%s3 + $0x30] sm:$0xff] %vm83, %v495
  %560 = vst.msk [vmem:[%s3 + $0x38] sm:$0xff] %vm83, %v496
  %561 = vst.msk [vmem:[%s3 + $0x40] sm:$0xff] %vm83, %v497
  %562 = vst.msk [vmem:[%s3 + $0x48] sm:$0xff] %vm83, %v498
  %563 = vst.msk [vmem:[%s3 + $0x50] sm:$0xff] %vm83, %v499
  %564 = vst.msk [vmem:[%s3 + $0x58] sm:$0xff] %vm83, %v500
  %565 = vst.msk [vmem:[%s3 + $0x60] sm:$0xff] %vm83, %v501
  %566 = vst.msk [vmem:[%s3 + $0x68] sm:$0xff] %vm83, %v502
  %567 = vst.msk [vmem:[%s3 + $0x70] sm:$0xff] %vm83, %v503
  %568 = vst.msk [vmem:[%s3 + $0x78] sm:$0xff] %vm83, %v504
  %569 = vst.msk [vmem:[%s3 + $0x80] sm:$0xff] %vm83, %v505
  %570 = vst.msk [vmem:[%s3 + $0x88] sm:$0xff] %vm83, %v506
  %571 = vst.msk [vmem:[%s3 + $0x90] sm:$0xff] %vm83, %v507
  %572 = vst.msk [vmem:[%s3 + $0x98] sm:$0xff] %vm83, %v508
  %573 = vst.msk [vmem:[%s3 + $0xa0] sm:$0xff] %vm83, %v509
  %574 = vst.msk [vmem:[%s3 + $0xa8] sm:$0xff] %vm83, %v510
  %575 = vst.msk [vmem:[%s3 + $0xb0] sm:$0xff] %vm83, %v511
  %576 = vst.msk [vmem:[%s3 + $0xb8] sm:$0xff] %vm83, %v512
  %577 = vst.msk [vmem:[%s3 + $0xc0] sm:$0xff] %vm83, %v513
  %578 = vst.msk [vmem:[%s3 + $0xc8] sm:$0xff] %vm83, %v514
  %579 = vst.msk [vmem:[%s3 + $0xd0] sm:$0xff] %vm83, %v515
  %580 = vst.msk [vmem:[%s3 + $0xd8] sm:$0xff] %vm83, %v516
  %581 = vst.msk [vmem:[%s3 + $0xe0] sm:$0xff] %vm83, %v517
  %582 = vst.msk [vmem:[%s3 + $0xe8] sm:$0xff] %vm83, %v518
  %583 = vst.msk [vmem:[%s3 + $0xf0] sm:$0xff] %vm83, %v519
  %584 = vst.msk [vmem:[%s3 + $0xf8] sm:$0xff] %vm83, %v520
  %585 = vst.msk [vmem:[%s3 + $0x100] sm:$0xff] %vm83, %v521
  %586 = vst.msk [vmem:[%s3 + $0x108] sm:$0xff] %vm83, %v522
  %587 = vst.msk [vmem:[%s3 + $0x110] sm:$0xff] %vm83, %v523
  %588 = vst.msk [vmem:[%s3 + $0x118] sm:$0xff] %vm83, %v524
  %589 = vst.msk [vmem:[%s3 + $0x120] sm:$0xff] %vm83, %v525
  %590 = vst.msk [vmem:[%s3 + $0x128] sm:$0xff] %vm83, %v526
  %591 = vst.msk [vmem:[%s3 + $0x130] sm:$0xff] %vm83, %v527
  %592 = vst.msk [vmem:[%s3 + $0x138] sm:$0xff] %vm83, %v528
  %593 = vst.msk [vmem:[%s3 + $0x140] sm:$0xff] %vm83, %v529
  %594 = vst.msk [vmem:[%s3 + $0x148] sm:$0xff] %vm83, %v530
  %595 = vst.msk [vmem:[%s3 + $0x150] sm:$0xff] %vm83, %v531
  %596 = vst.msk [vmem:[%s3 + $0x158] sm:$0xff] %vm83, %v532
  %597 = vst.msk [vmem:[%s3 + $0x160] sm:$0xff] %vm83, %v533
  %598 = vst.msk [vmem:[%s3 + $0x168] sm:$0xff] %vm83, %v534
  %599 = vst.msk [vmem:[%s3 + $0x170] sm:$0xff] %vm83, %v535
  %600 = vst.msk [vmem:[%s3 + $0x178] sm:$0xff] %vm83, %v536
  %601 = vst.msk [vmem:[%s3 + $0x180] sm:$0xff] %vm83, %v537
  %602 = vst.msk [vmem:[%s3 + $0x188] sm:$0xff] %vm83, %v538
  %603 = vst.msk [vmem:[%s3 + $0x190] sm:$0xff] %vm83, %v539
  %604 = vst.msk [vmem:[%s3 + $0x198] sm:$0xff] %vm83, %v540
  %605 = vst.msk [vmem:[%s3 + $0x1a0] sm:$0xff] %vm83, %v541
  %606 = vst.msk [vmem:[%s3 + $0x1a8] sm:$0xff] %vm83, %v542
  %607 = vst.msk [vmem:[%s3 + $0x1b0] sm:$0xff] %vm83, %v543
  %608 = vst.msk [vmem:[%s3 + $0x1b8] sm:$0xff] %vm83, %v544
  %609 = vst.msk [vmem:[%s3 + $0x1c0] sm:$0xff] %vm83, %v545
  %610 = vst.msk [vmem:[%s3 + $0x1c8] sm:$0xff] %vm83, %v546
  %611 = vst.msk [vmem:[%s3 + $0x1d0] sm:$0xff] %vm83, %v547
  %612 = vst.msk [vmem:[%s3 + $0x1d8] sm:$0xff] %vm83, %v548
  %613 = vst.msk [vmem:[%s3 + $0x1e0] sm:$0xff] %vm83, %v549
  %614 = vst.msk [vmem:[%s3 + $0x1e8] sm:$0xff] %vm83, %v550
  %615 = vst.msk [vmem:[%s3 + $0x1f0] sm:$0xff] %vm83, %v551
  %616 = vst.msk [vmem:[%s3 + $0x1f8] sm:$0xff] %vm83, %v552
  // Predicated region
  $region14: #{tpu_custom_call.1} parent=0 // pred_check
    _
  $region15: #{tpu_custom_call.1} parent=0 // pred_check_branch
    %618 = sbr.rel (0) target = $region17
  $region16: #{tpu_custom_call.1} parent=0 // pred_region
    _
  $region17: #{tpu_custom_call.1} parent=0 // pred_fallthru
    _
  // Predicated region
  $region18: #{tpu_custom_call.1} parent=0 // pred_check
    _
  $region19: #{tpu_custom_call.1} parent=0 // pred_check_branch
    %620 = sbr.rel (0) target = $region21
  $region20: #{tpu_custom_call.1} parent=0 // pred_region
    _
  $region21: #{tpu_custom_call.1} parent=0 // pred_fallthru
    _

</llo_original>
